<compile_context>
chip_gen: v5e
topology: v5e:2x2
jax: 0.10.0
libtpu: 0.0.40
codegen_flags: <defaults>
</compile_context>

<pallas_src>
import functools

import jax
import jax.numpy as jnp
from jax.experimental import pallas as pl
from jax.experimental.pallas import tpu as pltpu

LANE = 128


def _round_up(n, m):
    return ((n + m - 1) // m) * m


def _pad2d(a, rows, cols):
    pr, pc = rows - a.shape[0], cols - a.shape[1]
    if pr or pc:
        a = jnp.pad(a, ((0, pr), (0, pc)))
    return a


def deepfcn_kernel(x_ref,
                   w1_ref, b1_ref,
                   w2_ref, b2_ref,
                   w3a_ref, b3a_ref,
                   w3b_ref, b3b_ref,
                   w3c_ref, b3c_ref,
                   w4_ref, b4_ref,
                   w5_ref, b5_ref,
                   o_ref):
    def linear(h, w_ref, b_ref):
        w = w_ref[...]
        if h.dtype != w.dtype:
            # Weights are already in the compute dtype (pre-cast in the
            # wrapper); only the activation dot-operand is cast here.
            h = h.astype(w.dtype)
        # f32 accumulate on the MXU; bias add / ReLU stay f32.
        return jnp.dot(h, w, preferred_element_type=jnp.float32) + b_ref[...]

    h = x_ref[...]
    h = jnp.maximum(linear(h, w1_ref, b1_ref), 0.0)    # fc1 + first_relu
    h = jnp.maximum(linear(h, w2_ref, b2_ref), 0.0)    # fc2 (Linear + ReLU)
    h = jnp.maximum(linear(h, w3a_ref, b3a_ref), 0.0)  # fc3[0]
    h = jnp.maximum(linear(h, w3b_ref, b3b_ref), 0.0)  # fc3[1]
    h = jnp.maximum(linear(h, w3c_ref, b3c_ref), 0.0)  # fc3[2]
    h = jnp.maximum(linear(h, w4_ref, b4_ref), 0.0)    # fc4['fc4-1'] + relu
    o_ref[...] = linear(h, w5_ref, b5_ref).astype(o_ref.dtype)  # fc5


def deepfcn_forward(x, params, *, block_rows=2048, compute_dtype=jnp.bfloat16):
    """x: (batch, input_size) f32.  params: flat list [w1,b1,...,w5,b5] with
    weights already transposed to (in, out) and biases shaped (1, out)."""
    batch, in_feat = x.shape
    num_classes = params[-1].shape[-1]

    # Real and padded feature dims.  The input feature dim is left unpadded
    # (BlockSpec last dim == full array dim; MXU pads K for free); every other
    # dim is zero-padded to a multiple of 128 lanes for lane-dense matmuls and
    # an unmasked, lane-dense output store.
    dims = [in_feat, 256, 64, 64, 64, 64, 32, num_classes]
    pdims = [in_feat] + [_round_up(d, LANE) for d in dims[1:]]

    padded_params = []
    for li in range(7):
        w, b = params[2 * li], params[2 * li + 1]
        # Pre-cast weights to the compute dtype (bf16 MXU operands by default);
        # keep biases in f32 so bias+ReLU and accumulation stay f32.
        padded_params.append(
            _pad2d(w, pdims[li], pdims[li + 1]).astype(compute_dtype))
        padded_params.append(
            _pad2d(b, 1, pdims[li + 1]).astype(jnp.float32))

    # ---- batch tiling: no batch padding; partial tail block is handled by
    #      Pallas (OOB reads inert, OOB stores discarded).  tm is sized so
    #      large batches produce >= 2 grid steps (v7x has 2 TensorCores). ----
    tm = min(block_rows, max(8, _round_up(pl.cdiv(batch, 2), 8)))
    grid = (pl.cdiv(batch, tm),)

    x = x.astype(jnp.float32)
    in_specs = [pl.BlockSpec((tm, in_feat), lambda i: (i, 0))]
    # Weights/biases: full-array blocks, constant index_map -> resident in VMEM.
    for p in padded_params:
        in_specs.append(pl.BlockSpec(p.shape, lambda i: (0, 0)))
    out_spec = pl.BlockSpec((tm, pdims[-1]), lambda i: (i, 0))

    flops = 2 * batch * sum(a * b for a, b in zip(dims[:-1], dims[1:]))
    bytes_accessed = (x.size * 4 + batch * pdims[-1] * 4
                      + sum(int(p.size) * p.dtype.itemsize
                            for p in padded_params))

    out = pl.pallas_call(
        deepfcn_kernel,
        out_shape=jax.ShapeDtypeStruct((batch, pdims[-1]), jnp.float32),
        grid_spec=pltpu.PrefetchScalarGridSpec(
            num_scalar_prefetch=0,
            grid=grid,
            in_specs=in_specs,
            out_specs=out_spec),
        compiler_params=pltpu.CompilerParams(
            dimension_semantics=("parallel",),
            vmem_limit_bytes=32 * 1024 * 1024),
        cost_estimate=pl.CostEstimate(flops=flops, transcendentals=0,
                                      bytes_accessed=bytes_accessed),
    )(x, *padded_params)
    # Drop only the padded class columns (rows were never padded).
    return out[:, :num_classes]


def init_params(key, input_size, num_classes):
    """Deterministic synthetic init matching DeepFCN's layer shapes."""
    dims = [(input_size, 256), (256, 64), (64, 64), (64, 64), (64, 64),
            (64, 32), (32, num_classes)]
    params = []
    for fan_in, fan_out in dims:
        kw, kb, key = jax.random.split(key, 3)
        scale = 1.0 / jnp.sqrt(jnp.float32(fan_in))
        w = jax.random.uniform(kw, (fan_in, fan_out), jnp.float32, -scale, scale)
        b = jax.random.uniform(kb, (1, fan_out), jnp.float32, -scale, scale)
        params.extend([w, b])
    return params


if __name__ == "__main__":
    batch = 8
    input_size = 32
    num_classes = 10

    key = jax.random.PRNGKey(0)
    kx, kp = jax.random.split(key)
    x = jax.random.normal(kx, (batch, input_size), jnp.float32)
    params = init_params(kp, input_size, num_classes)

    # reference in plain JAX (f32)
    h = x
    for i in range(0, 12, 2):
        h = jnp.maximum(h @ params[i] + params[i + 1], 0.0)
    y_ref = h @ params[12] + params[13]

    # Default bf16-operand path (MXU-native on v5e/v6e/v7x; f32 accumulate).
    # TODO(synk): bf16 operand casts compound over 7 layers; tolerance is loose
    # by design -- use compute_dtype=jnp.float32 when exact parity is needed.
    fwd_bf16 = jax.jit(deepfcn_forward)
    y = fwd_bf16(x, params)
    jax.block_until_ready(y)
    assert y.shape == (batch, num_classes)
    assert jnp.allclose(y, y_ref, atol=2e-2, rtol=1e-1)

    # f32 path (PyTorch-matching semantics) for validation.
    fwd_f32 = jax.jit(functools.partial(deepfcn_forward,
                                        compute_dtype=jnp.float32))
    y_f32 = fwd_f32(x, params)
    jax.block_until_ready(y_f32)
    assert y_f32.shape == (batch, num_classes)
    assert jnp.allclose(y_f32, y_ref, atol=1e-5, rtol=1e-5)

    print("KERNEL_OK")
</pallas_src>

<mosaic_0001>
module attributes {stable_mosaic.version = 11 : i64} {
  func.func @deepfcn_kernel(%arg0: i32, %arg1: memref<8x32xf32, #tpu.memory_space<vmem>>, %arg2: memref<32x256xbf16, #tpu.memory_space<vmem>>, %arg3: memref<1x256xf32, #tpu.memory_space<vmem>>, %arg4: memref<256x128xbf16, #tpu.memory_space<vmem>>, %arg5: memref<1x128xf32, #tpu.memory_space<vmem>>, %arg6: memref<128x128xbf16, #tpu.memory_space<vmem>>, %arg7: memref<1x128xf32, #tpu.memory_space<vmem>>, %arg8: memref<128x128xbf16, #tpu.memory_space<vmem>>, %arg9: memref<1x128xf32, #tpu.memory_space<vmem>>, %arg10: memref<128x128xbf16, #tpu.memory_space<vmem>>, %arg11: memref<1x128xf32, #tpu.memory_space<vmem>>, %arg12: memref<128x128xbf16, #tpu.memory_space<vmem>>, %arg13: memref<1x128xf32, #tpu.memory_space<vmem>>, %arg14: memref<128x128xbf16, #tpu.memory_space<vmem>>, %arg15: memref<1x128xf32, #tpu.memory_space<vmem>>, %arg16: memref<8x128xf32, #tpu.memory_space<vmem>>) attributes {dimension_semantics = [#tpu.dimension_semantics<parallel>], iteration_bounds = array<i64: 1>, scalar_prefetch = 0 : i64, scratch_operands = 0 : i64, tpu.core_type = #tpu.core_type<tc>, window_params = [{transform_indices = @transform_0, window_bounds = array<i64: 8, 32>}, {pipeline_mode = #tpu.pipeline_mode<synchronous>, transform_indices = @transform_1, window_bounds = array<i64: 32, 256>}, {pipeline_mode = #tpu.pipeline_mode<synchronous>, transform_indices = @transform_2, window_bounds = array<i64: 1, 256>}, {pipeline_mode = #tpu.pipeline_mode<synchronous>, transform_indices = @transform_3, window_bounds = array<i64: 256, 128>}, {pipeline_mode = #tpu.pipeline_mode<synchronous>, transform_indices = @transform_4, window_bounds = array<i64: 1, 128>}, {pipeline_mode = #tpu.pipeline_mode<synchronous>, transform_indices = @transform_5, window_bounds = array<i64: 128, 128>}, {pipeline_mode = #tpu.pipeline_mode<synchronous>, transform_indices = @transform_6, window_bounds = array<i64: 1, 128>}, {pipeline_mode = #tpu.pipeline_mode<synchronous>, transform_indices = @transform_7, window_bounds = array<i64: 128, 128>}, {pipeline_mode = #tpu.pipeline_mode<synchronous>, transform_indices = @transform_8, window_bounds = array<i64: 1, 128>}, {pipeline_mode = #tpu.pipeline_mode<synchronous>, transform_indices = @transform_9, window_bounds = array<i64: 128, 128>}, {pipeline_mode = #tpu.pipeline_mode<synchronous>, transform_indices = @transform_10, window_bounds = array<i64: 1, 128>}, {pipeline_mode = #tpu.pipeline_mode<synchronous>, transform_indices = @transform_11, window_bounds = array<i64: 128, 128>}, {pipeline_mode = #tpu.pipeline_mode<synchronous>, transform_indices = @transform_12, window_bounds = array<i64: 1, 128>}, {pipeline_mode = #tpu.pipeline_mode<synchronous>, transform_indices = @transform_13, window_bounds = array<i64: 128, 128>}, {pipeline_mode = #tpu.pipeline_mode<synchronous>, transform_indices = @transform_14, window_bounds = array<i64: 1, 128>}, {transform_indices = @transform_15, window_bounds = array<i64: 8, 128>}]} {
    %c0 = arith.constant 0 : index
    %c0_0 = arith.constant 0 : index
    %0 = vector.load %arg1[%c0, %c0_0] : memref<8x32xf32, #tpu.memory_space<vmem>>, vector<8x32xf32>
    %c0_1 = arith.constant 0 : index
    %c0_2 = arith.constant 0 : index
    %1 = vector.load %arg2[%c0_1, %c0_2] : memref<32x256xbf16, #tpu.memory_space<vmem>>, vector<32x256xbf16>
    %2 = arith.truncf %0 : vector<8x32xf32> to vector<8x32xbf16>
    %cst = arith.constant dense<0.000000e+00> : vector<8x256xf32>
    %3 = tpu.matmul %2, %1, %cst {dimension_numbers = #tpu.dot_dimension_numbers<[1], [0], [0], [1], [0, 0, 1, 1], [], []>} : vector<8x32xbf16>, vector<32x256xbf16>, vector<8x256xf32> -> vector<8x256xf32>
    %c0_3 = arith.constant 0 : index
    %c0_4 = arith.constant 0 : index
    %4 = vector.load %arg3[%c0_3, %c0_4] : memref<1x256xf32, #tpu.memory_space<vmem>>, vector<1x256xf32>
    %5 = vector.broadcast %4 : vector<1x256xf32> to vector<8x256xf32>
    %6 = arith.addf %3, %5 : vector<8x256xf32>
    %cst_5 = arith.constant 0.000000e+00 : f32
    %7 = vector.broadcast %cst_5 : f32 to vector<8x256xf32>
    %8 = arith.maximumf %6, %7 : vector<8x256xf32>
    %c0_6 = arith.constant 0 : index
    %c0_7 = arith.constant 0 : index
    %9 = vector.load %arg4[%c0_6, %c0_7] : memref<256x128xbf16, #tpu.memory_space<vmem>>, vector<256x128xbf16>
    %10 = arith.truncf %8 : vector<8x256xf32> to vector<8x256xbf16>
    %cst_8 = arith.constant dense<0.000000e+00> : vector<8x128xf32>
    %11 = tpu.matmul %10, %9, %cst_8 {dimension_numbers = #tpu.dot_dimension_numbers<[1], [0], [0], [1], [0, 0, 1, 1], [], []>} : vector<8x256xbf16>, vector<256x128xbf16>, vector<8x128xf32> -> vector<8x128xf32>
    %c0_9 = arith.constant 0 : index
    %c0_10 = arith.constant 0 : index
    %12 = vector.load %arg5[%c0_9, %c0_10] : memref<1x128xf32, #tpu.memory_space<vmem>>, vector<1x128xf32>
    %13 = vector.broadcast %12 : vector<1x128xf32> to vector<8x128xf32>
    %14 = arith.addf %11, %13 : vector<8x128xf32>
    %cst_11 = arith.constant 0.000000e+00 : f32
    %15 = vector.broadcast %cst_11 : f32 to vector<8x128xf32>
    %16 = arith.maximumf %14, %15 : vector<8x128xf32>
    %c0_12 = arith.constant 0 : index
    %c0_13 = arith.constant 0 : index
    %17 = vector.load %arg6[%c0_12, %c0_13] : memref<128x128xbf16, #tpu.memory_space<vmem>>, vector<128x128xbf16>
    %18 = arith.truncf %16 : vector<8x128xf32> to vector<8x128xbf16>
    %cst_14 = arith.constant dense<0.000000e+00> : vector<8x128xf32>
    %19 = tpu.matmul %18, %17, %cst_14 {dimension_numbers = #tpu.dot_dimension_numbers<[1], [0], [0], [1], [0, 0, 1, 1], [], []>} : vector<8x128xbf16>, vector<128x128xbf16>, vector<8x128xf32> -> vector<8x128xf32>
    %c0_15 = arith.constant 0 : index
    %c0_16 = arith.constant 0 : index
    %20 = vector.load %arg7[%c0_15, %c0_16] : memref<1x128xf32, #tpu.memory_space<vmem>>, vector<1x128xf32>
    %21 = vector.broadcast %20 : vector<1x128xf32> to vector<8x128xf32>
    %22 = arith.addf %19, %21 : vector<8x128xf32>
    %cst_17 = arith.constant 0.000000e+00 : f32
    %23 = vector.broadcast %cst_17 : f32 to vector<8x128xf32>
    %24 = arith.maximumf %22, %23 : vector<8x128xf32>
    %c0_18 = arith.constant 0 : index
    %c0_19 = arith.constant 0 : index
    %25 = vector.load %arg8[%c0_18, %c0_19] : memref<128x128xbf16, #tpu.memory_space<vmem>>, vector<128x128xbf16>
    %26 = arith.truncf %24 : vector<8x128xf32> to vector<8x128xbf16>
    %cst_20 = arith.constant dense<0.000000e+00> : vector<8x128xf32>
    %27 = tpu.matmul %26, %25, %cst_20 {dimension_numbers = #tpu.dot_dimension_numbers<[1], [0], [0], [1], [0, 0, 1, 1], [], []>} : vector<8x128xbf16>, vector<128x128xbf16>, vector<8x128xf32> -> vector<8x128xf32>
    %c0_21 = arith.constant 0 : index
    %c0_22 = arith.constant 0 : index
    %28 = vector.load %arg9[%c0_21, %c0_22] : memref<1x128xf32, #tpu.memory_space<vmem>>, vector<1x128xf32>
    %29 = vector.broadcast %28 : vector<1x128xf32> to vector<8x128xf32>
    %30 = arith.addf %27, %29 : vector<8x128xf32>
    %cst_23 = arith.constant 0.000000e+00 : f32
    %31 = vector.broadcast %cst_23 : f32 to vector<8x128xf32>
    %32 = arith.maximumf %30, %31 : vector<8x128xf32>
    %c0_24 = arith.constant 0 : index
    %c0_25 = arith.constant 0 : index
    %33 = vector.load %arg10[%c0_24, %c0_25] : memref<128x128xbf16, #tpu.memory_space<vmem>>, vector<128x128xbf16>
    %34 = arith.truncf %32 : vector<8x128xf32> to vector<8x128xbf16>
    %cst_26 = arith.constant dense<0.000000e+00> : vector<8x128xf32>
    %35 = tpu.matmul %34, %33, %cst_26 {dimension_numbers = #tpu.dot_dimension_numbers<[1], [0], [0], [1], [0, 0, 1, 1], [], []>} : vector<8x128xbf16>, vector<128x128xbf16>, vector<8x128xf32> -> vector<8x128xf32>
    %c0_27 = arith.constant 0 : index
    %c0_28 = arith.constant 0 : index
    %36 = vector.load %arg11[%c0_27, %c0_28] : memref<1x128xf32, #tpu.memory_space<vmem>>, vector<1x128xf32>
    %37 = vector.broadcast %36 : vector<1x128xf32> to vector<8x128xf32>
    %38 = arith.addf %35, %37 : vector<8x128xf32>
    %cst_29 = arith.constant 0.000000e+00 : f32
    %39 = vector.broadcast %cst_29 : f32 to vector<8x128xf32>
    %40 = arith.maximumf %38, %39 : vector<8x128xf32>
    %c0_30 = arith.constant 0 : index
    %c0_31 = arith.constant 0 : index
    %41 = vector.load %arg12[%c0_30, %c0_31] : memref<128x128xbf16, #tpu.memory_space<vmem>>, vector<128x128xbf16>
    %42 = arith.truncf %40 : vector<8x128xf32> to vector<8x128xbf16>
    %cst_32 = arith.constant dense<0.000000e+00> : vector<8x128xf32>
    %43 = tpu.matmul %42, %41, %cst_32 {dimension_numbers = #tpu.dot_dimension_numbers<[1], [0], [0], [1], [0, 0, 1, 1], [], []>} : vector<8x128xbf16>, vector<128x128xbf16>, vector<8x128xf32> -> vector<8x128xf32>
    %c0_33 = arith.constant 0 : index
    %c0_34 = arith.constant 0 : index
    %44 = vector.load %arg13[%c0_33, %c0_34] : memref<1x128xf32, #tpu.memory_space<vmem>>, vector<1x128xf32>
    %45 = vector.broadcast %44 : vector<1x128xf32> to vector<8x128xf32>
    %46 = arith.addf %43, %45 : vector<8x128xf32>
    %cst_35 = arith.constant 0.000000e+00 : f32
    %47 = vector.broadcast %cst_35 : f32 to vector<8x128xf32>
    %48 = arith.maximumf %46, %47 : vector<8x128xf32>
    %c0_36 = arith.constant 0 : index
    %c0_37 = arith.constant 0 : index
    %49 = vector.load %arg14[%c0_36, %c0_37] : memref<128x128xbf16, #tpu.memory_space<vmem>>, vector<128x128xbf16>
    %50 = arith.truncf %48 : vector<8x128xf32> to vector<8x128xbf16>
    %cst_38 = arith.constant dense<0.000000e+00> : vector<8x128xf32>
    %51 = tpu.matmul %50, %49, %cst_38 {dimension_numbers = #tpu.dot_dimension_numbers<[1], [0], [0], [1], [0, 0, 1, 1], [], []>} : vector<8x128xbf16>, vector<128x128xbf16>, vector<8x128xf32> -> vector<8x128xf32>
    %c0_39 = arith.constant 0 : index
    %c0_40 = arith.constant 0 : index
    %52 = vector.load %arg15[%c0_39, %c0_40] : memref<1x128xf32, #tpu.memory_space<vmem>>, vector<1x128xf32>
    %53 = vector.broadcast %52 : vector<1x128xf32> to vector<8x128xf32>
    %54 = arith.addf %51, %53 : vector<8x128xf32>
    %c0_41 = arith.constant 0 : index
    %c0_42 = arith.constant 0 : index
    %55 = vector.load %arg16[%c0_41, %c0_42] : memref<8x128xf32, #tpu.memory_space<vmem>>, vector<8x128xf32>
    tpu.vector_store %arg16[%c0_41, %c0_42], %54 {strides = array<i32>} : memref<8x128xf32, #tpu.memory_space<vmem>>, vector<8x128xf32>,
    return
  }
  func.func @transform_0(%arg0: i32) -> (i32, i32) {
    %c0_i32 = arith.constant 0 : i32
    %c0_i32_0 = arith.constant 0 : i32
    return %arg0, %c0_i32 : i32, i32
  }
  func.func @transform_1(%arg0: i32) -> (i32, i32) {
    %c0_i32 = arith.constant 0 : i32
    %c0_i32_0 = arith.constant 0 : i32
    %c0_i32_1 = arith.constant 0 : i32
    return %c0_i32, %c0_i32_0 : i32, i32
  }
  func.func @transform_2(%arg0: i32) -> (i32, i32) {
    %c0_i32 = arith.constant 0 : i32
    %c0_i32_0 = arith.constant 0 : i32
    %c0_i32_1 = arith.constant 0 : i32
    return %c0_i32, %c0_i32_0 : i32, i32
  }
  func.func @transform_3(%arg0: i32) -> (i32, i32) {
    %c0_i32 = arith.constant 0 : i32
    %c0_i32_0 = arith.constant 0 : i32
    %c0_i32_1 = arith.constant 0 : i32
    return %c0_i32, %c0_i32_0 : i32, i32
  }
  func.func @transform_4(%arg0: i32) -> (i32, i32) {
    %c0_i32 = arith.constant 0 : i32
    %c0_i32_0 = arith.constant 0 : i32
    %c0_i32_1 = arith.constant 0 : i32
    return %c0_i32, %c0_i32_0 : i32, i32
  }
  func.func @transform_5(%arg0: i32) -> (i32, i32) {
    %c0_i32 = arith.constant 0 : i32
    %c0_i32_0 = arith.constant 0 : i32
    %c0_i32_1 = arith.constant 0 : i32
    return %c0_i32, %c0_i32_0 : i32, i32
  }
  func.func @transform_6(%arg0: i32) -> (i32, i32) {
    %c0_i32 = arith.constant 0 : i32
    %c0_i32_0 = arith.constant 0 : i32
    %c0_i32_1 = arith.constant 0 : i32
    return %c0_i32, %c0_i32_0 : i32, i32
  }
  func.func @transform_7(%arg0: i32) -> (i32, i32) {
    %c0_i32 = arith.constant 0 : i32
    %c0_i32_0 = arith.constant 0 : i32
    %c0_i32_1 = arith.constant 0 : i32
    return %c0_i32, %c0_i32_0 : i32, i32
  }
  func.func @transform_8(%arg0: i32) -> (i32, i32) {
    %c0_i32 = arith.constant 0 : i32
    %c0_i32_0 = arith.constant 0 : i32
    %c0_i32_1 = arith.constant 0 : i32
    return %c0_i32, %c0_i32_0 : i32, i32
  }
  func.func @transform_9(%arg0: i32) -> (i32, i32) {
    %c0_i32 = arith.constant 0 : i32
    %c0_i32_0 = arith.constant 0 : i32
    %c0_i32_1 = arith.constant 0 : i32
    return %c0_i32, %c0_i32_0 : i32, i32
  }
  func.func @transform_10(%arg0: i32) -> (i32, i32) {
    %c0_i32 = arith.constant 0 : i32
    %c0_i32_0 = arith.constant 0 : i32
    %c0_i32_1 = arith.constant 0 : i32
    return %c0_i32, %c0_i32_0 : i32, i32
  }
  func.func @transform_11(%arg0: i32) -> (i32, i32) {
    %c0_i32 = arith.constant 0 : i32
    %c0_i32_0 = arith.constant 0 : i32
    %c0_i32_1 = arith.constant 0 : i32
    return %c0_i32, %c0_i32_0 : i32, i32
  }
  func.func @transform_12(%arg0: i32) -> (i32, i32) {
    %c0_i32 = arith.constant 0 : i32
    %c0_i32_0 = arith.constant 0 : i32
    %c0_i32_1 = arith.constant 0 : i32
    return %c0_i32, %c0_i32_0 : i32, i32
  }
  func.func @transform_13(%arg0: i32) -> (i32, i32) {
    %c0_i32 = arith.constant 0 : i32
    %c0_i32_0 = arith.constant 0 : i32
    %c0_i32_1 = arith.constant 0 : i32
    return %c0_i32, %c0_i32_0 : i32, i32
  }
  func.func @transform_14(%arg0: i32) -> (i32, i32) {
    %c0_i32 = arith.constant 0 : i32
    %c0_i32_0 = arith.constant 0 : i32
    %c0_i32_1 = arith.constant 0 : i32
    return %c0_i32, %c0_i32_0 : i32, i32
  }
  func.func @transform_15(%arg0: i32) -> (i32, i32) {
    %c0_i32 = arith.constant 0 : i32
    %c0_i32_0 = arith.constant 0 : i32
    return %arg0, %c0_i32 : i32, i32
  }
}

</mosaic_0001>

<llo_original>
// kernel: deepfcn_forward.1
$region0: #{deepfcn_forward.1}
  #allocation0 [shape = 'u32[]', space=smem, size = 0x4, offset = 0x4, fixed_abs, tag = 'smem constant byte address 0x4 - core index']
  #allocation1 [shape = 'u32[72,128]{1,0:T(1,128)}', space=vmem, size = 0x9000, scoped, tag = 'internal scratch']
  %s0 = inlined_call_operand.vmem [shape: f32[8,32], index: 0, kind: input, shape index: {}]
  %s1 = inlined_call_operand.vmem [shape: bf16[32,256], index: 1, kind: input, shape index: {}]
  %s2 = inlined_call_operand.vmem [shape: f32[1,256], index: 2, kind: input, shape index: {}]
  %s3 = inlined_call_operand.vmem [shape: bf16[256,128], index: 3, kind: input, shape index: {}]
  %s4 = inlined_call_operand.vmem [shape: f32[1,128], index: 4, kind: input, shape index: {}]
  %s5 = inlined_call_operand.vmem [shape: bf16[128,128], index: 5, kind: input, shape index: {}]
  %s6 = inlined_call_operand.vmem [shape: f32[1,128], index: 6, kind: input, shape index: {}]
  %s7 = inlined_call_operand.vmem [shape: bf16[128,128], index: 7, kind: input, shape index: {}]
  %s8 = inlined_call_operand.vmem [shape: f32[1,128], index: 8, kind: input, shape index: {}]
  %s9 = inlined_call_operand.vmem [shape: bf16[128,128], index: 9, kind: input, shape index: {}]
  %s10 = inlined_call_operand.vmem [shape: f32[1,128], index: 10, kind: input, shape index: {}]
  %s11 = inlined_call_operand.vmem [shape: bf16[128,128], index: 11, kind: input, shape index: {}]
  %s12 = inlined_call_operand.vmem [shape: f32[1,128], index: 12, kind: input, shape index: {}]
  %s13 = inlined_call_operand.vmem [shape: bf16[128,128], index: 13, kind: input, shape index: {}]
  %s14 = inlined_call_operand.vmem [shape: f32[1,128], index: 14, kind: input, shape index: {}]
  %s15 = inlined_call_operand.hbm [shape: f32[8,128], index: 15, kind: output, shape index: {}]
  %s16 = sld [smem:[#allocation0]]
  $region70: #{deepfcn_forward.1} parent=0
    _
  %s18 = ssub.s32 1, %s16
  %s19 = scalar_select 0, %s18, %s16
  $region1: #{deepfcn_forward.1} parent=0
    #allocation2 [shape = 'u8[4096]{0}', space=vmem, size = 0x1000, scoped, tag = 'output window, operand 0, single buffered']
    #allocation3 [shape = 's32[1]{0}', space=sflag, size = 0x4, scoped, tag = 'scoped memory for deepfcn_forward.1']
    %20 = vsyncpa [#allocation3], 0
    // Predicated region
    $region2: #{deepfcn_forward.1} parent=1 // pred_check
      _
    $region3: #{deepfcn_forward.1} parent=1 // pred_check_branch
      %22 = sbr.rel (0) target = $region5
    $region4: #{deepfcn_forward.1} parent=1 // pred_region
      _
    $region5: #{deepfcn_forward.1} parent=1 // pred_fallthru
      _
    // Predicated region
    $region6: #{deepfcn_forward.1} parent=1 // pred_check
      _
    $region7: #{deepfcn_forward.1} parent=1 // pred_check_branch
      %24 = sbr.rel (0) target = $region9
    $region8: #{deepfcn_forward.1} parent=1 // pred_region
      _
    $region9: #{deepfcn_forward.1} parent=1 // pred_fallthru
      _
    // Predicated region
    $region10: #{deepfcn_forward.1} parent=1 // pred_check
      _
    $region11: #{deepfcn_forward.1} parent=1 // pred_check_branch
      %26 = sbr.rel (0) target = $region13
    $region12: #{deepfcn_forward.1} parent=1 // pred_region
      _
    $region13: #{deepfcn_forward.1} parent=1 // pred_fallthru
      _
    // Predicated region
    $region14: #{deepfcn_forward.1} parent=1 // pred_check
      _
    $region15: #{deepfcn_forward.1} parent=1 // pred_check_branch
      %28 = sbr.rel (0) target = $region17
    $region16: #{deepfcn_forward.1} parent=1 // pred_region
      _
    $region17: #{deepfcn_forward.1} parent=1 // pred_fallthru
      _
    // Predicated region
    $region18: #{deepfcn_forward.1} parent=1 // pred_check
      _
    $region19: #{deepfcn_forward.1} parent=1 // pred_check_branch
      %30 = sbr.rel (0) target = $region21
    $region20: #{deepfcn_forward.1} parent=1 // pred_region
      _
    $region21: #{deepfcn_forward.1} parent=1 // pred_fallthru
      _
    // Predicated region
    $region22: #{deepfcn_forward.1} parent=1 // pred_check
      _
    $region23: #{deepfcn_forward.1} parent=1 // pred_check_branch
      %32 = sbr.rel (0) target = $region25
    $region24: #{deepfcn_forward.1} parent=1 // pred_region
      _
    $region25: #{deepfcn_forward.1} parent=1 // pred_fallthru
      _
    // Predicated region
    $region26: #{deepfcn_forward.1} parent=1 // pred_check
      _
    $region27: #{deepfcn_forward.1} parent=1 // pred_check_branch
      %34 = sbr.rel (0) target = $region29
    $region28: #{deepfcn_forward.1} parent=1 // pred_region
      _
    $region29: #{deepfcn_forward.1} parent=1 // pred_fallthru
      _
    // Predicated region
    $region30: #{deepfcn_forward.1} parent=1 // pred_check
      _
    $region31: #{deepfcn_forward.1} parent=1 // pred_check_branch
      %36 = sbr.rel (0) target = $region33
    $region32: #{deepfcn_forward.1} parent=1 // pred_region
      _
    $region33: #{deepfcn_forward.1} parent=1 // pred_fallthru
      _
    // Predicated region
    $region34: #{deepfcn_forward.1} parent=1 // pred_check
      _
    $region35: #{deepfcn_forward.1} parent=1 // pred_check_branch
      %38 = sbr.rel (0) target = $region37
    $region36: #{deepfcn_forward.1} parent=1 // pred_region
      _
    $region37: #{deepfcn_forward.1} parent=1 // pred_fallthru
      _
    // Predicated region
    $region38: #{deepfcn_forward.1} parent=1 // pred_check
      _
    $region39: #{deepfcn_forward.1} parent=1 // pred_check_branch
      %40 = sbr.rel (0) target = $region41
    $region40: #{deepfcn_forward.1} parent=1 // pred_region
      _
    $region41: #{deepfcn_forward.1} parent=1 // pred_fallthru
      _
    // Predicated region
    $region42: #{deepfcn_forward.1} parent=1 // pred_check
      _
    $region43: #{deepfcn_forward.1} parent=1 // pred_check_branch
      %42 = sbr.rel (0) target = $region45
    $region44: #{deepfcn_forward.1} parent=1 // pred_region
      _
    $region45: #{deepfcn_forward.1} parent=1 // pred_fallthru
      _
    // Predicated region
    $region46: #{deepfcn_forward.1} parent=1 // pred_check
      _
    $region47: #{deepfcn_forward.1} parent=1 // pred_check_branch
      %44 = sbr.rel (0) target = $region49
    $region48: #{deepfcn_forward.1} parent=1 // pred_region
      _
    $region49: #{deepfcn_forward.1} parent=1 // pred_fallthru
      _
    // Predicated region
    $region50: #{deepfcn_forward.1} parent=1 // pred_check
      _
    $region51: #{deepfcn_forward.1} parent=1 // pred_check_branch
      %46 = sbr.rel (0) target = $region53
    $region52: #{deepfcn_forward.1} parent=1 // pred_region
      _
    $region53: #{deepfcn_forward.1} parent=1 // pred_fallthru
      _
    // Predicated region
    $region54: #{deepfcn_forward.1} parent=1 // pred_check
      _
    $region55: #{deepfcn_forward.1} parent=1 // pred_check_branch
      %48 = sbr.rel (0) target = $region57
    $region56: #{deepfcn_forward.1} parent=1 // pred_region
      _
    $region57: #{deepfcn_forward.1} parent=1 // pred_fallthru
      _
    // Predicated region
    $region58: #{deepfcn_forward.1} parent=1 // pred_check
      _
    $region59: #{deepfcn_forward.1} parent=1 // pred_check_branch
      %50 = sbr.rel (0) target = $region61
    $region60: #{deepfcn_forward.1} parent=1 // pred_region
      _
    $region61: #{deepfcn_forward.1} parent=1 // pred_fallthru
      _
    %v52 = vld [vmem:[%s0] sm:$0xff]
    %v53 = vld [vmem:[%s1] sm:$0xff]
    %v54 = vld [vmem:[%s1 + $0x8] sm:$0xff]
    %v55 = vld [vmem:[%s1 + $0x10] sm:$0xff]
    %v56 = vld [vmem:[%s1 + $0x18] sm:$0xff]
    %v57 = vpack.c.bf16 %v52, %v52
    %v58 = vld [vmem:[%s2] sm:$0x3]
    %v60 = vperm.slane %v58, 0
    %v61 = vperm.slane %v58, 1
    %v68 = vunpack.c.l.b16 %v53
    %v69 = vunpack.c.h.b16 %v53
    %v70 = vunpack.c.l.b16 %v54
    %v71 = vunpack.c.h.b16 %v54
    %v72 = vunpack.c.l.b16 %v55
    %v73 = vunpack.c.h.b16 %v55
    %v74 = vunpack.c.l.b16 %v56
    %v75 = vunpack.c.h.b16 %v56
    %v76 = vpack.c.b16 %v70, %v68
    %v77 = vpack.c.b16 %v71, %v69
    %v78 = vpack.c.b16 %v74, %v72
    %v79 = vpack.c.b16 %v75, %v73
    %vm84 = vcmask 261120
    %v86 = vsel %vm84, %v57, 0
    %88 = vmatpush.bf16.msra.mxu0 0
    %89 = vmatpush.bf16.msra.mxu0 0
    %90 = vmatpush.bf16.msra.mxu0 0
    %91 = vmatpush.bf16.msra.mxu0 0
    %92 = vmatpush.bf16.msra.mxu0 0
    %93 = vmatpush.bf16.msra.mxu0 0
    %94 = vmatpush.bf16.msra.mxu0 %v78
    %95 = vmatpush.bf16.msra.mxu0 %v76
    %96 = vmatmul.bf16.gmra.mxu0 %v86
    %v97 = vpop.f32.mrf.mxu0
    %v98 = vadd.f32 %v60, %v97
    %v99 = vpop.f32.mrf.mxu0
    %100 = vdwg.mxu0
    %101 = vmatpush.bf16.msra.mxu0 0
    %102 = vmatpush.bf16.msra.mxu0 0
    %103 = vmatpush.bf16.msra.mxu0 0
    %104 = vmatpush.bf16.msra.mxu0 0
    %105 = vmatpush.bf16.msra.mxu0 0
    %106 = vmatpush.bf16.msra.mxu0 0
    %107 = vmatpush.bf16.msra.mxu0 %v79
    %108 = vmatpush.bf16.msra.mxu0 %v77
    %109 = vmatmul.bf16.gmra.mxu0 %v86
    %v110 = vpop.f32.mrf.mxu0
    %v111 = vadd.f32 %v61, %v110
    %v112 = vpop.f32.mrf.mxu0
    %113 = vdwg.mxu0
    %v114 = vmax.f32 %v98, 0.0
    %v115 = vmax.f32 %v111, 0.0
    %v116 = vld [vmem:[%s3] sm:$0xf]
    %v117 = vld [vmem:[%s3 + $0x4] sm:$0xf]
    %v118 = vld [vmem:[%s3 + $0x8] sm:$0xf]
    %v119 = vld [vmem:[%s3 + $0xc] sm:$0xf]
    %v120 = vld [vmem:[%s3 + $0x10] sm:$0xf]
    %v121 = vld [vmem:[%s3 + $0x14] sm:$0xf]
    %v122 = vld [vmem:[%s3 + $0x18] sm:$0xf]
    %v123 = vld [vmem:[%s3 + $0x1c] sm:$0xf]
    %v124 = vld [vmem:[%s3 + $0x20] sm:$0xf]
    %v125 = vld [vmem:[%s3 + $0x24] sm:$0xf]
    %v126 = vld [vmem:[%s3 + $0x28] sm:$0xf]
    %v127 = vld [vmem:[%s3 + $0x2c] sm:$0xf]
    %v128 = vld [vmem:[%s3 + $0x30] sm:$0xf]
    %v129 = vld [vmem:[%s3 + $0x34] sm:$0xf]
    %v130 = vld [vmem:[%s3 + $0x38] sm:$0xf]
    %v131 = vld [vmem:[%s3 + $0x3c] sm:$0xf]
    %v132 = vld [vmem:[%s3 + $0x40] sm:$0xf]
    %v133 = vld [vmem:[%s3 + $0x44] sm:$0xf]
    %v134 = vld [vmem:[%s3 + $0x48] sm:$0xf]
    %v135 = vld [vmem:[%s3 + $0x4c] sm:$0xf]
    %v136 = vld [vmem:[%s3 + $0x50] sm:$0xf]
    %v137 = vld [vmem:[%s3 + $0x54] sm:$0xf]
    %v138 = vld [vmem:[%s3 + $0x58] sm:$0xf]
    %v139 = vld [vmem:[%s3 + $0x5c] sm:$0xf]
    %v140 = vld [vmem:[%s3 + $0x60] sm:$0xf]
    %v141 = vld [vmem:[%s3 + $0x64] sm:$0xf]
    %v142 = vld [vmem:[%s3 + $0x68] sm:$0xf]
    %v143 = vld [vmem:[%s3 + $0x6c] sm:$0xf]
    %v144 = vld [vmem:[%s3 + $0x70] sm:$0xf]
    %v145 = vld [vmem:[%s3 + $0x74] sm:$0xf]
    %v146 = vld [vmem:[%s3 + $0x78] sm:$0xf]
    %v147 = vld [vmem:[%s3 + $0x7c] sm:$0xf]
    %v148 = vpack.c.bf16 %v114, %v114
    %v149 = vpack.c.bf16 %v115, %v115
    %v150 = vld [vmem:[%s4] sm:$0x1]
    %v152 = vperm.slane %v150, 0
    %v186 = vunpack.c.l.b16 %v116
    %v187 = vunpack.c.l.b16 %v117
    %v188 = vunpack.c.l.b16 %v118
    %v189 = vunpack.c.l.b16 %v119
    %v190 = vunpack.c.l.b16 %v120
    %v191 = vunpack.c.l.b16 %v121
    %v192 = vunpack.c.l.b16 %v122
    %v193 = vunpack.c.l.b16 %v123
    %v194 = vunpack.c.l.b16 %v124
    %v195 = vunpack.c.l.b16 %v125
    %v196 = vunpack.c.l.b16 %v126
    %v197 = vunpack.c.l.b16 %v127
    %v198 = vunpack.c.l.b16 %v128
    %v199 = vunpack.c.l.b16 %v129
    %v200 = vunpack.c.l.b16 %v130
    %v201 = vunpack.c.l.b16 %v131
    %v202 = vunpack.c.l.b16 %v132
    %v203 = vunpack.c.l.b16 %v133
    %v204 = vunpack.c.l.b16 %v134
    %v205 = vunpack.c.l.b16 %v135
    %v206 = vunpack.c.l.b16 %v136
    %v207 = vunpack.c.l.b16 %v137
    %v208 = vunpack.c.l.b16 %v138
    %v209 = vunpack.c.l.b16 %v139
    %v210 = vunpack.c.l.b16 %v140
    %v211 = vunpack.c.l.b16 %v141
    %v212 = vunpack.c.l.b16 %v142
    %v213 = vunpack.c.l.b16 %v143
    %v214 = vunpack.c.l.b16 %v144
    %v215 = vunpack.c.l.b16 %v145
    %v216 = vunpack.c.l.b16 %v146
    %v217 = vunpack.c.l.b16 %v147
    %v218 = vpack.c.b16 %v187, %v186
    %v219 = vpack.c.b16 %v189, %v188
    %v220 = vpack.c.b16 %v191, %v190
    %v221 = vpack.c.b16 %v193, %v192
    %v222 = vpack.c.b16 %v195, %v194
    %v223 = vpack.c.b16 %v197, %v196
    %v224 = vpack.c.b16 %v199, %v198
    %v225 = vpack.c.b16 %v201, %v200
    %v226 = vpack.c.b16 %v203, %v202
    %v227 = vpack.c.b16 %v205, %v204
    %v228 = vpack.c.b16 %v207, %v206
    %v229 = vpack.c.b16 %v209, %v208
    %v230 = vpack.c.b16 %v211, %v210
    %v231 = vpack.c.b16 %v213, %v212
    %v232 = vpack.c.b16 %v215, %v214
    %v233 = vpack.c.b16 %v217, %v216
    %250 = vmatpush.bf16.msra.mxu0 %v225
    %251 = vmatpush.bf16.msra.mxu0 %v224
    %252 = vmatpush.bf16.msra.mxu0 %v223
    %253 = vmatpush.bf16.msra.mxu0 %v222
    %254 = vmatpush.bf16.msra.mxu0 %v221
    %255 = vmatpush.bf16.msra.mxu0 %v220
    %256 = vmatpush.bf16.msra.mxu0 %v219
    %257 = vmatpush.bf16.msra.mxu0 %v218
    %258 = vmatmul.bf16.gmra.mxu0 %v148
    %v259 = vpop.f32.mrf.mxu0
    %v260 = vadd.f32 %v152, %v259
    %v261 = vpop.f32.mrf.mxu0
    %262 = vdwg.mxu0
    %263 = vmatpush.bf16.msra.mxu0 %v233
    %264 = vmatpush.bf16.msra.mxu0 %v232
    %265 = vmatpush.bf16.msra.mxu0 %v231
    %266 = vmatpush.bf16.msra.mxu0 %v230
    %267 = vmatpush.bf16.msra.mxu0 %v229
    %268 = vmatpush.bf16.msra.mxu0 %v228
    %269 = vmatpush.bf16.msra.mxu0 %v227
    %270 = vmatpush.bf16.msra.mxu0 %v226
    %271 = vmatmul.bf16.gmra.mxu0 %v149
    %v272 = vpop.f32.mrf.mxu0
    %v273 = vadd.f32 %v260, %v272
    %v274 = vpop.f32.mrf.mxu0
    %275 = vdwg.mxu0
    %v276 = vmax.f32 %v273, 0.0
    %v277 = vld [vmem:[%s5] sm:$0xf]
    %v278 = vld [vmem:[%s5 + $0x4] sm:$0xf]
    %v279 = vld [vmem:[%s5 + $0x8] sm:$0xf]
    %v280 = vld [vmem:[%s5 + $0xc] sm:$0xf]
    %v281 = vld [vmem:[%s5 + $0x10] sm:$0xf]
    %v282 = vld [vmem:[%s5 + $0x14] sm:$0xf]
    %v283 = vld [vmem:[%s5 + $0x18] sm:$0xf]
    %v284 = vld [vmem:[%s5 + $0x1c] sm:$0xf]
    %v285 = vld [vmem:[%s5 + $0x20] sm:$0xf]
    %v286 = vld [vmem:[%s5 + $0x24] sm:$0xf]
    %v287 = vld [vmem:[%s5 + $0x28] sm:$0xf]
    %v288 = vld [vmem:[%s5 + $0x2c] sm:$0xf]
    %v289 = vld [vmem:[%s5 + $0x30] sm:$0xf]
    %v290 = vld [vmem:[%s5 + $0x34] sm:$0xf]
    %v291 = vld [vmem:[%s5 + $0x38] sm:$0xf]
    %v292 = vld [vmem:[%s5 + $0x3c] sm:$0xf]
    %v293 = vpack.c.bf16 %v276, %v276
    %v294 = vld [vmem:[%s6] sm:$0x1]
    %v296 = vperm.slane %v294, 0
    %v314 = vunpack.c.l.b16 %v277
    %v315 = vunpack.c.l.b16 %v278
    %v316 = vunpack.c.l.b16 %v279
    %v317 = vunpack.c.l.b16 %v280
    %v318 = vunpack.c.l.b16 %v281
    %v319 = vunpack.c.l.b16 %v282
    %v320 = vunpack.c.l.b16 %v283
    %v321 = vunpack.c.l.b16 %v284
    %v322 = vunpack.c.l.b16 %v285
    %v323 = vunpack.c.l.b16 %v286
    %v324 = vunpack.c.l.b16 %v287
    %v325 = vunpack.c.l.b16 %v288
    %v326 = vunpack.c.l.b16 %v289
    %v327 = vunpack.c.l.b16 %v290
    %v328 = vunpack.c.l.b16 %v291
    %v329 = vunpack.c.l.b16 %v292
    %v330 = vpack.c.b16 %v315, %v314
    %v331 = vpack.c.b16 %v317, %v316
    %v332 = vpack.c.b16 %v319, %v318
    %v333 = vpack.c.b16 %v321, %v320
    %v334 = vpack.c.b16 %v323, %v322
    %v335 = vpack.c.b16 %v325, %v324
    %v336 = vpack.c.b16 %v327, %v326
    %v337 = vpack.c.b16 %v329, %v328
    %346 = vmatpush.bf16.msra.mxu0 %v337
    %347 = vmatpush.bf16.msra.mxu0 %v336
    %348 = vmatpush.bf16.msra.mxu0 %v335
    %349 = vmatpush.bf16.msra.mxu0 %v334
    %350 = vmatpush.bf16.msra.mxu0 %v333
    %351 = vmatpush.bf16.msra.mxu0 %v332
    %352 = vmatpush.bf16.msra.mxu0 %v331
    %353 = vmatpush.bf16.msra.mxu0 %v330
    %354 = vmatmul.bf16.gmra.mxu0 %v293
    %v355 = vpop.f32.mrf.mxu0
    %v356 = vadd.f32 %v296, %v355
    %v357 = vpop.f32.mrf.mxu0
    %358 = vdwg.mxu0
    %v359 = vmax.f32 %v356, 0.0
    %v360 = vld [vmem:[%s7] sm:$0xf]
    %v361 = vld [vmem:[%s7 + $0x4] sm:$0xf]
    %v362 = vld [vmem:[%s7 + $0x8] sm:$0xf]
    %v363 = vld [vmem:[%s7 + $0xc] sm:$0xf]
    %v364 = vld [vmem:[%s7 + $0x10] sm:$0xf]
    %v365 = vld [vmem:[%s7 + $0x14] sm:$0xf]
    %v366 = vld [vmem:[%s7 + $0x18] sm:$0xf]
    %v367 = vld [vmem:[%s7 + $0x1c] sm:$0xf]
    %v368 = vld [vmem:[%s7 + $0x20] sm:$0xf]
    %v369 = vld [vmem:[%s7 + $0x24] sm:$0xf]
    %v370 = vld [vmem:[%s7 + $0x28] sm:$0xf]
    %v371 = vld [vmem:[%s7 + $0x2c] sm:$0xf]
    %v372 = vld [vmem:[%s7 + $0x30] sm:$0xf]
    %v373 = vld [vmem:[%s7 + $0x34] sm:$0xf]
    %v374 = vld [vmem:[%s7 + $0x38] sm:$0xf]
    %v375 = vld [vmem:[%s7 + $0x3c] sm:$0xf]
    %v376 = vpack.c.bf16 %v359, %v359
    %v377 = vld [vmem:[%s8] sm:$0x1]
    %v379 = vperm.slane %v377, 0
    %v397 = vunpack.c.l.b16 %v360
    %v398 = vunpack.c.l.b16 %v361
    %v399 = vunpack.c.l.b16 %v362
    %v400 = vunpack.c.l.b16 %v363
    %v401 = vunpack.c.l.b16 %v364
    %v402 = vunpack.c.l.b16 %v365
    %v403 = vunpack.c.l.b16 %v366
    %v404 = vunpack.c.l.b16 %v367
    %v405 = vunpack.c.l.b16 %v368
    %v406 = vunpack.c.l.b16 %v369
    %v407 = vunpack.c.l.b16 %v370
    %v408 = vunpack.c.l.b16 %v371
    %v409 = vunpack.c.l.b16 %v372
    %v410 = vunpack.c.l.b16 %v373
    %v411 = vunpack.c.l.b16 %v374
    %v412 = vunpack.c.l.b16 %v375
    %v413 = vpack.c.b16 %v398, %v397
    %v414 = vpack.c.b16 %v400, %v399
    %v415 = vpack.c.b16 %v402, %v401
    %v416 = vpack.c.b16 %v404, %v403
    %v417 = vpack.c.b16 %v406, %v405
    %v418 = vpack.c.b16 %v408, %v407
    %v419 = vpack.c.b16 %v410, %v409
    %v420 = vpack.c.b16 %v412, %v411
    %429 = vmatpush.bf16.msra.mxu0 %v420
    %430 = vmatpush.bf16.msra.mxu0 %v419
    %431 = vmatpush.bf16.msra.mxu0 %v418
    %432 = vmatpush.bf16.msra.mxu0 %v417
    %433 = vmatpush.bf16.msra.mxu0 %v416
    %434 = vmatpush.bf16.msra.mxu0 %v415
    %435 = vmatpush.bf16.msra.mxu0 %v414
    %436 = vmatpush.bf16.msra.mxu0 %v413
    %437 = vmatmul.bf16.gmra.mxu0 %v376
    %v438 = vpop.f32.mrf.mxu0
    %v439 = vadd.f32 %v379, %v438
    %v440 = vpop.f32.mrf.mxu0
    %441 = vdwg.mxu0
    %v442 = vmax.f32 %v439, 0.0
    %v443 = vld [vmem:[%s9] sm:$0xf]
    %v444 = vld [vmem:[%s9 + $0x4] sm:$0xf]
    %v445 = vld [vmem:[%s9 + $0x8] sm:$0xf]
    %v446 = vld [vmem:[%s9 + $0xc] sm:$0xf]
    %v447 = vld [vmem:[%s9 + $0x10] sm:$0xf]
    %v448 = vld [vmem:[%s9 + $0x14] sm:$0xf]
    %v449 = vld [vmem:[%s9 + $0x18] sm:$0xf]
    %v450 = vld [vmem:[%s9 + $0x1c] sm:$0xf]
    %v451 = vld [vmem:[%s9 + $0x20] sm:$0xf]
    %v452 = vld [vmem:[%s9 + $0x24] sm:$0xf]
    %v453 = vld [vmem:[%s9 + $0x28] sm:$0xf]
    %v454 = vld [vmem:[%s9 + $0x2c] sm:$0xf]
    %v455 = vld [vmem:[%s9 + $0x30] sm:$0xf]
    %v456 = vld [vmem:[%s9 + $0x34] sm:$0xf]
    %v457 = vld [vmem:[%s9 + $0x38] sm:$0xf]
    %v458 = vld [vmem:[%s9 + $0x3c] sm:$0xf]
    %v459 = vpack.c.bf16 %v442, %v442
    %v460 = vld [vmem:[%s10] sm:$0x1]
    %v462 = vperm.slane %v460, 0
    %v480 = vunpack.c.l.b16 %v443
    %v481 = vunpack.c.l.b16 %v444
    %v482 = vunpack.c.l.b16 %v445
    %v483 = vunpack.c.l.b16 %v446
    %v484 = vunpack.c.l.b16 %v447
    %v485 = vunpack.c.l.b16 %v448
    %v486 = vunpack.c.l.b16 %v449
    %v487 = vunpack.c.l.b16 %v450
    %v488 = vunpack.c.l.b16 %v451
    %v489 = vunpack.c.l.b16 %v452
    %v490 = vunpack.c.l.b16 %v453
    %v491 = vunpack.c.l.b16 %v454
    %v492 = vunpack.c.l.b16 %v455
    %v493 = vunpack.c.l.b16 %v456
    %v494 = vunpack.c.l.b16 %v457
    %v495 = vunpack.c.l.b16 %v458
    %v496 = vpack.c.b16 %v481, %v480
    %v497 = vpack.c.b16 %v483, %v482
    %v498 = vpack.c.b16 %v485, %v484
    %v499 = vpack.c.b16 %v487, %v486
    %v500 = vpack.c.b16 %v489, %v488
    %v501 = vpack.c.b16 %v491, %v490
    %v502 = vpack.c.b16 %v493, %v492
    %v503 = vpack.c.b16 %v495, %v494
    %512 = vmatpush.bf16.msra.mxu0 %v503
    %513 = vmatpush.bf16.msra.mxu0 %v502
    %514 = vmatpush.bf16.msra.mxu0 %v501
    %515 = vmatpush.bf16.msra.mxu0 %v500
    %516 = vmatpush.bf16.msra.mxu0 %v499
    %517 = vmatpush.bf16.msra.mxu0 %v498
    %518 = vmatpush.bf16.msra.mxu0 %v497
    %519 = vmatpush.bf16.msra.mxu0 %v496
    %520 = vmatmul.bf16.gmra.mxu0 %v459
    %v521 = vpop.f32.mrf.mxu0
    %v522 = vadd.f32 %v462, %v521
    %v523 = vpop.f32.mrf.mxu0
    %524 = vdwg.mxu0
    %v525 = vmax.f32 %v522, 0.0
    %v526 = vld [vmem:[%s11] sm:$0xf]
    %v527 = vld [vmem:[%s11 + $0x4] sm:$0xf]
    %v528 = vld [vmem:[%s11 + $0x8] sm:$0xf]
    %v529 = vld [vmem:[%s11 + $0xc] sm:$0xf]
    %v530 = vld [vmem:[%s11 + $0x10] sm:$0xf]
    %v531 = vld [vmem:[%s11 + $0x14] sm:$0xf]
    %v532 = vld [vmem:[%s11 + $0x18] sm:$0xf]
    %v533 = vld [vmem:[%s11 + $0x1c] sm:$0xf]
    %v534 = vld [vmem:[%s11 + $0x20] sm:$0xf]
    %v535 = vld [vmem:[%s11 + $0x24] sm:$0xf]
    %v536 = vld [vmem:[%s11 + $0x28] sm:$0xf]
    %v537 = vld [vmem:[%s11 + $0x2c] sm:$0xf]
    %v538 = vld [vmem:[%s11 + $0x30] sm:$0xf]
    %v539 = vld [vmem:[%s11 + $0x34] sm:$0xf]
    %v540 = vld [vmem:[%s11 + $0x38] sm:$0xf]
    %v541 = vld [vmem:[%s11 + $0x3c] sm:$0xf]
    %v542 = vpack.c.bf16 %v525, %v525
    %v543 = vld [vmem:[%s12] sm:$0x1]
    %v545 = vperm.slane %v543, 0
    %v563 = vunpack.c.l.b16 %v526
    %v564 = vunpack.c.l.b16 %v527
    %v565 = vunpack.c.l.b16 %v528
    %v566 = vunpack.c.l.b16 %v529
    %v567 = vunpack.c.l.b16 %v530
    %v568 = vunpack.c.l.b16 %v531
    %v569 = vunpack.c.l.b16 %v532
    %v570 = vunpack.c.l.b16 %v533
    %v571 = vunpack.c.l.b16 %v534
    %v572 = vunpack.c.l.b16 %v535
    %v573 = vunpack.c.l.b16 %v536
    %v574 = vunpack.c.l.b16 %v537
    %v575 = vunpack.c.l.b16 %v538
    %v576 = vunpack.c.l.b16 %v539
    %v577 = vunpack.c.l.b16 %v540
    %v578 = vunpack.c.l.b16 %v541
    %v579 = vpack.c.b16 %v564, %v563
    %v580 = vpack.c.b16 %v566, %v565
    %v581 = vpack.c.b16 %v568, %v567
    %v582 = vpack.c.b16 %v570, %v569
    %v583 = vpack.c.b16 %v572, %v571
    %v584 = vpack.c.b16 %v574, %v573
    %v585 = vpack.c.b16 %v576, %v575
    %v586 = vpack.c.b16 %v578, %v577
    %595 = vmatpush.bf16.msra.mxu0 %v586
    %596 = vmatpush.bf16.msra.mxu0 %v585
    %597 = vmatpush.bf16.msra.mxu0 %v584
    %598 = vmatpush.bf16.msra.mxu0 %v583
    %599 = vmatpush.bf16.msra.mxu0 %v582
    %600 = vmatpush.bf16.msra.mxu0 %v581
    %601 = vmatpush.bf16.msra.mxu0 %v580
    %602 = vmatpush.bf16.msra.mxu0 %v579
    %603 = vmatmul.bf16.gmra.mxu0 %v542
    %v604 = vpop.f32.mrf.mxu0
    %v605 = vadd.f32 %v545, %v604
    %v606 = vpop.f32.mrf.mxu0
    %607 = vdwg.mxu0
    %v608 = vmax.f32 %v605, 0.0
    %v609 = vld [vmem:[%s13] sm:$0xf]
    %v610 = vld [vmem:[%s13 + $0x4] sm:$0xf]
    %v611 = vld [vmem:[%s13 + $0x8] sm:$0xf]
    %v612 = vld [vmem:[%s13 + $0xc] sm:$0xf]
    %v613 = vld [vmem:[%s13 + $0x10] sm:$0xf]
    %v614 = vld [vmem:[%s13 + $0x14] sm:$0xf]
    %v615 = vld [vmem:[%s13 + $0x18] sm:$0xf]
    %v616 = vld [vmem:[%s13 + $0x1c] sm:$0xf]
    %v617 = vld [vmem:[%s13 + $0x20] sm:$0xf]
    %v618 = vld [vmem:[%s13 + $0x24] sm:$0xf]
    %v619 = vld [vmem:[%s13 + $0x28] sm:$0xf]
    %v620 = vld [vmem:[%s13 + $0x2c] sm:$0xf]
    %v621 = vld [vmem:[%s13 + $0x30] sm:$0xf]
    %v622 = vld [vmem:[%s13 + $0x34] sm:$0xf]
    %v623 = vld [vmem:[%s13 + $0x38] sm:$0xf]
    %v624 = vld [vmem:[%s13 + $0x3c] sm:$0xf]
    %v625 = vpack.c.bf16 %v608, %v608
    %v626 = vld [vmem:[%s14] sm:$0x1]
    %v628 = vperm.slane %v626, 0
    %v646 = vunpack.c.l.b16 %v609
    %v647 = vunpack.c.l.b16 %v610
    %v648 = vunpack.c.l.b16 %v611
    %v649 = vunpack.c.l.b16 %v612
    %v650 = vunpack.c.l.b16 %v613
    %v651 = vunpack.c.l.b16 %v614
    %v652 = vunpack.c.l.b16 %v615
    %v653 = vunpack.c.l.b16 %v616
    %v654 = vunpack.c.l.b16 %v617
    %v655 = vunpack.c.l.b16 %v618
    %v656 = vunpack.c.l.b16 %v619
    %v657 = vunpack.c.l.b16 %v620
    %v658 = vunpack.c.l.b16 %v621
    %v659 = vunpack.c.l.b16 %v622
    %v660 = vunpack.c.l.b16 %v623
    %v661 = vunpack.c.l.b16 %v624
    %v662 = vpack.c.b16 %v647, %v646
    %v663 = vpack.c.b16 %v649, %v648
    %v664 = vpack.c.b16 %v651, %v650
    %v665 = vpack.c.b16 %v653, %v652
    %v666 = vpack.c.b16 %v655, %v654
    %v667 = vpack.c.b16 %v657, %v656
    %v668 = vpack.c.b16 %v659, %v658
    %v669 = vpack.c.b16 %v661, %v660
    %678 = vmatpush.bf16.msra.mxu0 %v669
    %679 = vmatpush.bf16.msra.mxu0 %v668
    %680 = vmatpush.bf16.msra.mxu0 %v667
    %681 = vmatpush.bf16.msra.mxu0 %v666
    %682 = vmatpush.bf16.msra.mxu0 %v665
    %683 = vmatpush.bf16.msra.mxu0 %v664
    %684 = vmatpush.bf16.msra.mxu0 %v663
    %685 = vmatpush.bf16.msra.mxu0 %v662
    %686 = vmatmul.bf16.gmra.mxu0 %v625
    %v687 = vpop.f32.mrf.mxu0
    %v688 = vadd.f32 %v628, %v687
    %v689 = vpop.f32.mrf.mxu0
    %690 = vdwg.mxu0
    %691 = vst [vmem:[#allocation2] sm:$0xff] %v688
    // Predicated region
    $region62: #{deepfcn_forward.1} parent=1 // pred_check
      _
    $region63: #{deepfcn_forward.1} parent=1 // pred_check_branch
      %693 = sbr.rel (0) target = $region65
    $region64: #{deepfcn_forward.1} parent=1 // pred_region
      %695 = vsyncadd [#allocation3], 0
      %s697 = sshll.u32 [#allocation2], 4
      %s698 = int_to_ptr.vmem [resolvable:$true] %s697
      %s699 = sshll.u32 %s15, 4
      %s700 = int_to_ptr.hbm [resolvable:$true] %s699
      %702 = dma.vmem_to_hbm [thread:$0]  %s698, 128, %s700, [#allocation3]
    $region65: #{deepfcn_forward.1} parent=1 // pred_fallthru
      _
    // Predicated region
    $region66: #{deepfcn_forward.1} parent=1 // pred_check
      _
    $region67: #{deepfcn_forward.1} parent=1 // pred_check_branch
      %704 = sbr.rel (0) target = $region69
    $region68: #{deepfcn_forward.1} parent=1 // pred_region
      %706 = dma.done [#allocation3], 128
    $region69: #{deepfcn_forward.1} parent=1 // pred_fallthru
      _
    %707 = vsyncpa [#allocation3], 1

</llo_original>
